<compile_context>
chip_gen: v7x
topology: tpu7x:2x2x1
jax: 0.10.0
libtpu: 0.0.40
codegen_flags: <defaults>
</compile_context>

<pallas_src>
import functools

import numpy as np

import jax
import jax.numpy as jnp
from jax.experimental import pallas as pl
from jax.experimental.pallas import tpu as pltpu


def _round_up(x, m):
    return (x + m - 1) // m * m


def _cdiv(a, b):
    return -(-a // b)


# ----------------------------------------------------------------------------
# Fused kernel: matmul + mask(bias fold) + per-split log-softmax / softmax
# ----------------------------------------------------------------------------
def _fused_multicat_kernel(x_ref, w_ref, scale_ref, shift_ref, seg_ref,
                           logp_ref, probs_ref, *, action_dims):
    # logits = (x @ W) * scale + shift  ==  where(mask, x @ W + b, -1e8)
    logits = jnp.dot(x_ref[...], w_ref[...], preferred_element_type=jnp.float32)
    logits = logits * scale_ref[...] + shift_ref[...]          # (TB, A_pad) f32

    tb, a_pad = logits.shape
    col = jax.lax.broadcasted_iota(jnp.int32, (1, a_pad), 1)
    neg_inf = jnp.float32(-jnp.inf)

    # Only per-split work: masked max + broadcast back (cheap VPU/XLU ops).
    m_bcast = jnp.zeros_like(logits)
    off = 0
    for n in action_dims:                                      # static, unrolled
        seg = (col >= off) & (col < off + n)                   # (1, A_pad)
        m = jnp.max(jnp.where(seg, logits, neg_inf), axis=-1, keepdims=True)
        m_bcast = jnp.where(seg, m, m_bcast)
        off += n

    # Single full-width exp / log / divide.  Segment partition sums go through
    # the MXU (block-diagonal ones matrix) which has plenty of slack.
    e = jnp.exp(logits - m_bcast)                              # 1 transcendental
    s_bcast = jnp.dot(e, seg_ref[...], preferred_element_type=jnp.float32)
    logp_ref[...] = logits - m_bcast - jnp.log(s_bcast)        # exact log-softmax
    probs_ref[...] = e / s_bcast                               # exact: rows sum to 1


def multicategorical_forward(x, w_pad, scale_pad, shift_pad, seg_mat,
                             action_dims, *, block_b=256):
    """x: (B, D); w_pad: (D, A_pad) (f32 or bf16); scale/shift: (1, A_pad) f32;
    seg_mat: (A_pad, A_pad) f32 block-diagonal ones.
    Returns (logp_all, probs_all), each (B, A) f32 with A = sum(action_dims)."""
    B, D = x.shape
    A_pad = w_pad.shape[1]
    A = sum(action_dims)
    matmul_dtype = w_pad.dtype

    # Adaptive batch tiling: TB multiple of 8, <= block_b, minimal padding,
    # >= 2 grid steps whenever possible so both v7x TensorCores get work.
    block_b = max(8, (int(block_b) // 8) * 8)
    B8 = _round_up(max(B, 1), 8)
    n_blk = max(_cdiv(B8, block_b), 2 if B8 >= 16 else 1)
    TB = _round_up(_cdiv(B8, n_blk), 8)
    B_pad = n_blk * TB

    x = x.astype(matmul_dtype)          # bf16 path: half-width HBM->VMEM traffic
    if B_pad != B:
        x = jnp.pad(x, ((0, B_pad - B), (0, 0)))   # at most a few extra rows

    kernel = functools.partial(
        _fused_multicat_kernel,
        action_dims=tuple(int(n) for n in action_dims))

    itm = jnp.dtype(matmul_dtype).itemsize
    # VMEM budget from actual block sizes (double-buffered streams + temporaries),
    # capped at v7x's 64 MiB physical VMEM.
    vmem_est = (2 * TB * D * itm                 # x
                + 2 * D * A_pad * itm            # W (grid-invariant)
                + 2 * 2 * A_pad * 4              # scale + shift
                + 2 * A_pad * A_pad * 4          # segment-sum matrix
                + 2 * 2 * TB * A_pad * 4         # two f32 outputs
                + 8 * TB * A_pad * 4)            # in-kernel temporaries
    vmem_limit = int(min(64 * 2**20, max(32 * 2**20, 2 * vmem_est)))
    # TODO(synk): for very large D / A_pad add a K grid axis (accumulator
    # scratch) and mark W/seg_mat with pipeline_mode=pl.Buffered(1).

    cost = pl.CostEstimate(
        flops=2 * B_pad * A_pad * (D + A_pad),
        transcendentals=2 * B_pad * A_pad,
        bytes_accessed=(B_pad * D * itm + D * A_pad * itm
                        + (2 + A_pad) * A_pad * 4
                        + 2 * B_pad * A_pad * 4),
    )

    logp_all, probs_all = pl.pallas_call(
        kernel,
        out_shape=(
            jax.ShapeDtypeStruct((B_pad, A_pad), jnp.float32),
            jax.ShapeDtypeStruct((B_pad, A_pad), jnp.float32),
        ),
        grid=(n_blk,),
        in_specs=[
            pl.BlockSpec((TB, D), lambda i: (i, 0)),          # x: batch-tiled
            pl.BlockSpec((D, A_pad), lambda i: (0, 0)),       # W: grid-invariant
            pl.BlockSpec((1, A_pad), lambda i: (0, 0)),       # mask scale
            pl.BlockSpec((1, A_pad), lambda i: (0, 0)),       # mask shift (bias fold)
            pl.BlockSpec((A_pad, A_pad), lambda i: (0, 0)),   # segment-sum matrix
        ],
        out_specs=(
            pl.BlockSpec((TB, A_pad), lambda i: (i, 0)),
            pl.BlockSpec((TB, A_pad), lambda i: (i, 0)),
        ),
        compiler_params=pltpu.CompilerParams(
            dimension_semantics=("parallel",),
            vmem_limit_bytes=vmem_limit),
        cost_estimate=cost,
    )(x, w_pad, scale_pad, shift_pad, seg_mat)

    return logp_all[:B, :A], probs_all[:B, :A]


# ----------------------------------------------------------------------------
# MultiCategorical module (JAX / Pallas version)
# ----------------------------------------------------------------------------
class MultiCategorical:
    def __init__(self, latent_dim, nvec, key, *, matmul_dtype=jnp.float32):
        self.latent_dim = int(latent_dim)
        self.action_dims = tuple(int(n) for n in nvec)
        A = sum(self.action_dims)
        self.A = A
        self.A_pad = _round_up(A, 128)     # lane-aligned output width
        self.matmul_dtype = matmul_dtype

        # Orthogonal init, gain=0.01 (same as the PyTorch init_), bias = 0.
        w = jax.nn.initializers.orthogonal(scale=0.01)(
            key, (self.latent_dim, A), jnp.float32)
        self.w = w
        self.b = jnp.zeros((1, A), jnp.float32)
        # Padded + pre-cast weight: bf16 halves HBM/VMEM bytes on all generations.
        self.w_pad = jnp.pad(w, ((0, 0), (0, self.A_pad - A))).astype(matmul_dtype)
        self.b_pad = jnp.zeros((1, self.A_pad), jnp.float32)

        # Block-diagonal ones matrix for MXU segment sums (identity on padding
        # columns so padded lanes stay finite).
        seg = np.zeros((self.A_pad, self.A_pad), np.float32)
        off = 0
        for n in self.action_dims:
            seg[off:off + n, off:off + n] = 1.0
            off += n
        for i in range(A, self.A_pad):
            seg[i, i] = 1.0
        self.seg_mat = jnp.asarray(seg)

    def forward(self, x, action_mask=None):
        """Returns list of (normalized_logits, probs) per action dimension,
        mirroring self.distribution = [Categorical(...)] in the PyTorch module."""
        A, A_pad = self.A, self.A_pad
        if action_mask is None or (hasattr(action_mask, "__len__")
                                   and len(action_mask) == 0):
            scale = jnp.ones((1, A_pad), jnp.float32)
            shift = self.b_pad
        else:
            mask = jnp.asarray(action_mask).reshape(1, A) != 0
            scale = jnp.pad(mask.astype(jnp.float32), ((0, 0), (0, A_pad - A)),
                            constant_values=1.0)
            shift = jnp.where(mask, self.b, jnp.float32(-100000000.0))
            shift = jnp.pad(shift, ((0, 0), (0, A_pad - A)))

        logp_all, probs_all = multicategorical_forward(
            x, self.w_pad, scale, shift, self.seg_mat, self.action_dims)

        # Per-split views (cheap slices of lane-dense outputs).
        # TODO(synk): sample()/log_prob()/entropy()/mode() are methods on the
        # torch.distributions objects, outside this forward pass; not ported.
        dists = []
        off = 0
        for n in self.action_dims:
            dists.append((logp_all[:, off:off + n], probs_all[:, off:off + n]))
            off += n
        return dists


# ----------------------------------------------------------------------------
# main
# ----------------------------------------------------------------------------
if __name__ == "__main__":
    key = jax.random.PRNGKey(0)
    k_w, k_x = jax.random.split(key)

    B = 2
    latent_dim = 32
    nvec = (3, 4, 5)

    module = MultiCategorical(latent_dim, nvec, k_w)
    x = jax.random.normal(k_x, (B, latent_dim), dtype=jnp.float32)

    # action mask: allow everything except the last entry of each split
    mask = []
    for n in nvec:
        mask += [1] * (n - 1) + [0]
    mask = jnp.asarray(mask, dtype=jnp.int32)

    dists = module.forward(x, action_mask=mask)
    dists = jax.block_until_ready(dists)

    # Reference check in plain JAX (exact where(-1e8) semantics).
    logits_ref = x @ module.w + module.b
    logits_ref = jnp.where(mask[None, :] != 0, logits_ref, -100000000.0)
    off = 0
    for (logp, probs), n in zip(dists, nvec):
        split = logits_ref[:, off:off + n]
        ref_logp = split - jax.scipy.special.logsumexp(split, axis=-1, keepdims=True)
        ref_probs = jax.nn.softmax(split, axis=-1)
        assert jnp.allclose(logp, ref_logp, atol=5e-4), "logp mismatch"
        assert jnp.allclose(probs, ref_probs, atol=5e-4), "probs mismatch"
        off += n

    # Also exercise the bf16-MXU path (weights pre-cast at init, x cast in wrapper).
    module_bf16 = MultiCategorical(latent_dim, nvec, k_w, matmul_dtype=jnp.bfloat16)
    dists_bf16 = jax.block_until_ready(module_bf16.forward(x, action_mask=mask))
    for (logp_f32, probs_f32), (logp_b, probs_b) in zip(dists, dists_bf16):
        assert jnp.allclose(jnp.sum(probs_b, axis=-1), 1.0, atol=1e-3)
        assert jnp.allclose(probs_f32, probs_b, atol=3e-2)

    print("KERNEL_OK")
</pallas_src>

<mosaic_0001>
module attributes {stable_mosaic.version = 11 : i64} {
  func.func @_fused_multicat_kernel(%arg0: i32, %arg1: memref<8x32xf32, #tpu.memory_space<vmem>>, %arg2: memref<32x128xf32, #tpu.memory_space<vmem>>, %arg3: memref<1x128xf32, #tpu.memory_space<vmem>>, %arg4: memref<1x128xf32, #tpu.memory_space<vmem>>, %arg5: memref<128x128xf32, #tpu.memory_space<vmem>>, %arg6: memref<8x128xf32, #tpu.memory_space<vmem>>, %arg7: memref<8x128xf32, #tpu.memory_space<vmem>>) attributes {dimension_semantics = [#tpu.dimension_semantics<parallel>], iteration_bounds = array<i64: 1>, scalar_prefetch = 0 : i64, scratch_operands = 0 : i64, tpu.core_type = #tpu.core_type<tc>, window_params = [{transform_indices = @transform_0, window_bounds = array<i64: 8, 32>}, {pipeline_mode = #tpu.pipeline_mode<synchronous>, transform_indices = @transform_1, window_bounds = array<i64: 32, 128>}, {pipeline_mode = #tpu.pipeline_mode<synchronous>, transform_indices = @transform_2, window_bounds = array<i64: 1, 128>}, {pipeline_mode = #tpu.pipeline_mode<synchronous>, transform_indices = @transform_3, window_bounds = array<i64: 1, 128>}, {pipeline_mode = #tpu.pipeline_mode<synchronous>, transform_indices = @transform_4, window_bounds = array<i64: 128, 128>}, {transform_indices = @transform_5, window_bounds = array<i64: 8, 128>}, {transform_indices = @transform_6, window_bounds = array<i64: 8, 128>}]} {
    %c0 = arith.constant 0 : index
    %c0_0 = arith.constant 0 : index
    %0 = vector.load %arg1[%c0, %c0_0] : memref<8x32xf32, #tpu.memory_space<vmem>>, vector<8x32xf32>
    %c0_1 = arith.constant 0 : index
    %c0_2 = arith.constant 0 : index
    %1 = vector.load %arg2[%c0_1, %c0_2] : memref<32x128xf32, #tpu.memory_space<vmem>>, vector<32x128xf32>
    %cst = arith.constant dense<0.000000e+00> : vector<8x128xf32>
    %2 = tpu.matmul %0, %1, %cst {dimension_numbers = #tpu.dot_dimension_numbers<[1], [0], [0], [1], [0, 0, 1, 1], [], []>} : vector<8x32xf32>, vector<32x128xf32>, vector<8x128xf32> -> vector<8x128xf32>
    %c0_3 = arith.constant 0 : index
    %c0_4 = arith.constant 0 : index
    %3 = vector.load %arg3[%c0_3, %c0_4] : memref<1x128xf32, #tpu.memory_space<vmem>>, vector<1x128xf32>
    %4 = vector.broadcast %3 : vector<1x128xf32> to vector<8x128xf32>
    %5 = arith.mulf %2, %4 : vector<8x128xf32>
    %c0_5 = arith.constant 0 : index
    %c0_6 = arith.constant 0 : index
    %6 = vector.load %arg4[%c0_5, %c0_6] : memref<1x128xf32, #tpu.memory_space<vmem>>, vector<1x128xf32>
    %7 = vector.broadcast %6 : vector<1x128xf32> to vector<8x128xf32>
    %8 = arith.addf %5, %7 : vector<8x128xf32>
    %9 = tpu.iota {dimensions = array<i32: 1>} : vector<1x128xi32>
    %cst_7 = arith.constant 0.000000e+00 : f32
    %10 = vector.broadcast %cst_7 : f32 to vector<8x128xf32>
    %c0_i32 = arith.constant 0 : i32
    %11 = vector.broadcast %c0_i32 : i32 to vector<1x128xi32>
    %12 = arith.cmpi sge, %9, %11 : vector<1x128xi32>
    %c3_i32 = arith.constant 3 : i32
    %13 = vector.broadcast %c3_i32 : i32 to vector<1x128xi32>
    %14 = arith.cmpi slt, %9, %13 : vector<1x128xi32>
    %15 = arith.andi %12, %14 : vector<1x128xi1>
    %cst_8 = arith.constant 0xFF800000 : f32
    %16 = vector.shape_cast %15 : vector<1x128xi1> to vector<1x128xi1>
    %17 = vector.broadcast %16 : vector<1x128xi1> to vector<8x128xi1>
    %18 = vector.broadcast %cst_8 : f32 to vector<8x128xf32>
    %19 = arith.select %17, %8, %18 : vector<8x128xi1>, vector<8x128xf32>
    %cst_9 = arith.constant dense<0xFF800000> : vector<8xf32>
    %20 = vector.multi_reduction <maximumf>, %19, %cst_9 [1] : vector<8x128xf32> to vector<8xf32>
    %21 = vector.shape_cast %20 : vector<8xf32> to vector<8x1xf32>
    %22 = vector.shape_cast %15 : vector<1x128xi1> to vector<1x128xi1>
    %23 = vector.broadcast %22 : vector<1x128xi1> to vector<8x128xi1>
    %24 = vector.shape_cast %21 : vector<8x1xf32> to vector<8x1xf32>
    %25 = vector.broadcast %24 : vector<8x1xf32> to vector<8x128xf32>
    %26 = arith.select %23, %25, %10 : vector<8x128xi1>, vector<8x128xf32>
    %c3_i32_10 = arith.constant 3 : i32
    %27 = vector.broadcast %c3_i32_10 : i32 to vector<1x128xi32>
    %28 = arith.cmpi sge, %9, %27 : vector<1x128xi32>
    %c7_i32 = arith.constant 7 : i32
    %29 = vector.broadcast %c7_i32 : i32 to vector<1x128xi32>
    %30 = arith.cmpi slt, %9, %29 : vector<1x128xi32>
    %31 = arith.andi %28, %30 : vector<1x128xi1>
    %cst_11 = arith.constant 0xFF800000 : f32
    %32 = vector.shape_cast %31 : vector<1x128xi1> to vector<1x128xi1>
    %33 = vector.broadcast %32 : vector<1x128xi1> to vector<8x128xi1>
    %34 = vector.broadcast %cst_11 : f32 to vector<8x128xf32>
    %35 = arith.select %33, %8, %34 : vector<8x128xi1>, vector<8x128xf32>
    %cst_12 = arith.constant dense<0xFF800000> : vector<8xf32>
    %36 = vector.multi_reduction <maximumf>, %35, %cst_12 [1] : vector<8x128xf32> to vector<8xf32>
    %37 = vector.shape_cast %36 : vector<8xf32> to vector<8x1xf32>
    %38 = vector.shape_cast %31 : vector<1x128xi1> to vector<1x128xi1>
    %39 = vector.broadcast %38 : vector<1x128xi1> to vector<8x128xi1>
    %40 = vector.shape_cast %37 : vector<8x1xf32> to vector<8x1xf32>
    %41 = vector.broadcast %40 : vector<8x1xf32> to vector<8x128xf32>
    %42 = arith.select %39, %41, %26 : vector<8x128xi1>, vector<8x128xf32>
    %c7_i32_13 = arith.constant 7 : i32
    %43 = vector.broadcast %c7_i32_13 : i32 to vector<1x128xi32>
    %44 = arith.cmpi sge, %9, %43 : vector<1x128xi32>
    %c12_i32 = arith.constant 12 : i32
    %45 = vector.broadcast %c12_i32 : i32 to vector<1x128xi32>
    %46 = arith.cmpi slt, %9, %45 : vector<1x128xi32>
    %47 = arith.andi %44, %46 : vector<1x128xi1>
    %cst_14 = arith.constant 0xFF800000 : f32
    %48 = vector.shape_cast %47 : vector<1x128xi1> to vector<1x128xi1>
    %49 = vector.broadcast %48 : vector<1x128xi1> to vector<8x128xi1>
    %50 = vector.broadcast %cst_14 : f32 to vector<8x128xf32>
    %51 = arith.select %49, %8, %50 : vector<8x128xi1>, vector<8x128xf32>
    %cst_15 = arith.constant dense<0xFF800000> : vector<8xf32>
    %52 = vector.multi_reduction <maximumf>, %51, %cst_15 [1] : vector<8x128xf32> to vector<8xf32>
    %53 = vector.shape_cast %52 : vector<8xf32> to vector<8x1xf32>
    %54 = vector.shape_cast %47 : vector<1x128xi1> to vector<1x128xi1>
    %55 = vector.broadcast %54 : vector<1x128xi1> to vector<8x128xi1>
    %56 = vector.shape_cast %53 : vector<8x1xf32> to vector<8x1xf32>
    %57 = vector.broadcast %56 : vector<8x1xf32> to vector<8x128xf32>
    %58 = arith.select %55, %57, %42 : vector<8x128xi1>, vector<8x128xf32>
    %59 = arith.subf %8, %58 : vector<8x128xf32>
    %60 = math.exp %59 : vector<8x128xf32>
    %c0_16 = arith.constant 0 : index
    %c0_17 = arith.constant 0 : index
    %61 = vector.load %arg5[%c0_16, %c0_17] : memref<128x128xf32, #tpu.memory_space<vmem>>, vector<128x128xf32>
    %cst_18 = arith.constant dense<0.000000e+00> : vector<8x128xf32>
    %62 = tpu.matmul %60, %61, %cst_18 {dimension_numbers = #tpu.dot_dimension_numbers<[1], [0], [0], [1], [0, 0, 1, 1], [], []>} : vector<8x128xf32>, vector<128x128xf32>, vector<8x128xf32> -> vector<8x128xf32>
    %63 = arith.subf %8, %58 : vector<8x128xf32>
    %64 = math.log %62 : vector<8x128xf32>
    %65 = arith.subf %63, %64 : vector<8x128xf32>
    %c0_19 = arith.constant 0 : index
    %c0_20 = arith.constant 0 : index
    %66 = vector.load %arg6[%c0_19, %c0_20] : memref<8x128xf32, #tpu.memory_space<vmem>>, vector<8x128xf32>
    tpu.vector_store %arg6[%c0_19, %c0_20], %65 {strides = array<i32>} : memref<8x128xf32, #tpu.memory_space<vmem>>, vector<8x128xf32>,
    %67 = arith.divf %60, %62 : vector<8x128xf32>
    %c0_21 = arith.constant 0 : index
    %c0_22 = arith.constant 0 : index
    %68 = vector.load %arg7[%c0_21, %c0_22] : memref<8x128xf32, #tpu.memory_space<vmem>>, vector<8x128xf32>
    tpu.vector_store %arg7[%c0_21, %c0_22], %67 {strides = array<i32>} : memref<8x128xf32, #tpu.memory_space<vmem>>, vector<8x128xf32>,
    return
  }
  func.func @transform_0(%arg0: i32) -> (i32, i32) {
    %c0_i32 = arith.constant 0 : i32
    %c0_i32_0 = arith.constant 0 : i32
    return %arg0, %c0_i32 : i32, i32
  }
  func.func @transform_1(%arg0: i32) -> (i32, i32) {
    %c0_i32 = arith.constant 0 : i32
    %c0_i32_0 = arith.constant 0 : i32
    %c0_i32_1 = arith.constant 0 : i32
    return %c0_i32, %c0_i32_0 : i32, i32
  }
  func.func @transform_2(%arg0: i32) -> (i32, i32) {
    %c0_i32 = arith.constant 0 : i32
    %c0_i32_0 = arith.constant 0 : i32
    %c0_i32_1 = arith.constant 0 : i32
    return %c0_i32, %c0_i32_0 : i32, i32
  }
  func.func @transform_3(%arg0: i32) -> (i32, i32) {
    %c0_i32 = arith.constant 0 : i32
    %c0_i32_0 = arith.constant 0 : i32
    %c0_i32_1 = arith.constant 0 : i32
    return %c0_i32, %c0_i32_0 : i32, i32
  }
  func.func @transform_4(%arg0: i32) -> (i32, i32) {
    %c0_i32 = arith.constant 0 : i32
    %c0_i32_0 = arith.constant 0 : i32
    %c0_i32_1 = arith.constant 0 : i32
    return %c0_i32, %c0_i32_0 : i32, i32
  }
  func.func @transform_5(%arg0: i32) -> (i32, i32) {
    %c0_i32 = arith.constant 0 : i32
    %c0_i32_0 = arith.constant 0 : i32
    return %arg0, %c0_i32 : i32, i32
  }
  func.func @transform_6(%arg0: i32) -> (i32, i32) {
    %c0_i32 = arith.constant 0 : i32
    %c0_i32_0 = arith.constant 0 : i32
    return %arg0, %c0_i32 : i32, i32
  }
}

</mosaic_0001>

<llo_original>
// kernel: tpu_custom_call.1
$region0: #{tpu_custom_call.1}
  #allocation0 [shape = 'u32[]', space=smem, size = 0x4, offset = 0x4, fixed_abs, tag = 'smem constant byte address 0x4 - core index']
  #allocation1 [shape = 'u32[144,128]{1,0:T(1,128)}', space=vmem, size = 0x12000, scoped, tag = 'internal scratch']
  %s0 = inlined_call_operand.hbm [shape: f32[8,32], index: 0, kind: input, shape index: {}]
  %s1 = inlined_call_operand.hbm [shape: f32[32,128], index: 1, kind: input, shape index: {}]
  %s2 = inlined_call_operand.vmem [shape: f32[1,128], index: 2, kind: input, shape index: {}]
  %s3 = inlined_call_operand.vmem [shape: f32[1,128], index: 3, kind: input, shape index: {}]
  %s4 = inlined_call_operand.hbm [shape: f32[128,128], index: 4, kind: input, shape index: {}]
  %s5 = inlined_call_operand.hbm [shape: f32[8,128], index: 5, kind: output, shape index: {0}]
  %s6 = inlined_call_operand.hbm [shape: f32[8,128], index: 6, kind: output, shape index: {1}]
  %7 = xla_tuple %s5, %s6
  %s8 = sld [smem:[#allocation0]]
  $region50: #{tpu_custom_call.1} parent=0
    _
  %s10 = ssub.s32 1, %s8
  %s11 = scalar_select 0, %s10, %s8
  $region1: #{tpu_custom_call.1} parent=0
    #allocation2 [shape = 'u8[4096]{0}', space=vmem, size = 0x1000, scoped, tag = 'input window, operand 0, single buffered']
    #allocation3 [shape = 's32[1]{0}', space=sflag, size = 0x4, scoped, tag = 'scoped memory for tpu_custom_call.1']
    #allocation4 [shape = 's32[1]{0}', space=sflag, size = 0x4, scoped, tag = 'scoped memory for tpu_custom_call.1']
    #allocation5 [shape = 'u8[16384]{0}', space=vmem, size = 0x4000, scoped, tag = 'input window, operand 1, single buffered']
    #allocation6 [shape = 's32[1]{0}', space=sflag, size = 0x4, scoped, tag = 'scoped memory for tpu_custom_call.1']
    #allocation7 [shape = 'u8[65536]{0}', space=vmem, size = 0x10000, scoped, tag = 'input window, operand 4, single buffered']
    #allocation8 [shape = 'u8[4096]{0}', space=vmem, size = 0x1000, scoped, tag = 'output window, operand 0, single buffered']
    #allocation9 [shape = 'u8[4096]{0}', space=vmem, size = 0x1000, scoped, tag = 'output window, operand 1, single buffered']
    #allocation10 [shape = 's32[1]{0}', space=sflag, size = 0x4, scoped, tag = 'scoped memory for tpu_custom_call.1']
    %12 = vsyncpa [#allocation3], 0
    %13 = vsyncpa [#allocation6], 0
    %14 = vsyncpa [#allocation4], 0
    %15 = vsyncpa [#allocation10], 0
    // Predicated region
    $region2: #{tpu_custom_call.1} parent=1 // pred_check
      _
    $region3: #{tpu_custom_call.1} parent=1 // pred_check_branch
      %17 = sbr.rel (0) target = $region5
    $region4: #{tpu_custom_call.1} parent=1 // pred_region
      %s19 = ssub.s32 128, 128
      %20 = vsyncadd [#allocation3], %s19
      %s22 = sshll.u32 [#allocation2], 4
      %s23 = int_to_ptr.vmem [resolvable:$true] %s22
      %25 = dma.hbm_to_vmem [thread:$0]  %s0, 128, %s23, [#allocation3]
    $region5: #{tpu_custom_call.1} parent=1 // pred_fallthru
      _
    // Predicated region
    $region6: #{tpu_custom_call.1} parent=1 // pred_check
      _
    $region7: #{tpu_custom_call.1} parent=1 // pred_check_branch
      %27 = sbr.rel (0) target = $region9
    $region8: #{tpu_custom_call.1} parent=1 // pred_region
      %s29 = ssub.s32 512, 512
      %30 = vsyncadd [#allocation6], %s29
      %s31 = sshll.u32 [#allocation5], 4
      %s32 = int_to_ptr.vmem [resolvable:$true] %s31
      %37 = dma.hbm_to_vmem [thread:$0]  %s1, 512, %s32, [#allocation6], 128, 128, 8
    $region9: #{tpu_custom_call.1} parent=1 // pred_fallthru
      _
    // Predicated region
    $region10: #{tpu_custom_call.1} parent=1 // pred_check
      _
    $region11: #{tpu_custom_call.1} parent=1 // pred_check_branch
      %39 = sbr.rel (0) target = $region13
    $region12: #{tpu_custom_call.1} parent=1 // pred_region
      _
    $region13: #{tpu_custom_call.1} parent=1 // pred_fallthru
      _
    // Predicated region
    $region14: #{tpu_custom_call.1} parent=1 // pred_check
      _
    $region15: #{tpu_custom_call.1} parent=1 // pred_check_branch
      %41 = sbr.rel (0) target = $region17
    $region16: #{tpu_custom_call.1} parent=1 // pred_region
      _
    $region17: #{tpu_custom_call.1} parent=1 // pred_fallthru
      _
    // Predicated region
    $region18: #{tpu_custom_call.1} parent=1 // pred_check
      _
    $region19: #{tpu_custom_call.1} parent=1 // pred_check_branch
      %43 = sbr.rel (0) target = $region21
    $region20: #{tpu_custom_call.1} parent=1 // pred_region
      %s45 = ssub.s32 2048, 2048
      %46 = vsyncadd [#allocation6], %s45
      %s47 = sshll.u32 [#allocation7], 4
      %s48 = int_to_ptr.vmem [resolvable:$true] %s47
      %53 = dma.hbm_to_vmem [thread:$0]  %s4, 2048, %s48, [#allocation6], 128, 128, 8
    $region21: #{tpu_custom_call.1} parent=1 // pred_fallthru
      _
    // Predicated region
    $region22: #{tpu_custom_call.1} parent=1 // pred_check
      _
    $region23: #{tpu_custom_call.1} parent=1 // pred_check_branch
      %55 = sbr.rel (0) target = $region25
    $region24: #{tpu_custom_call.1} parent=1 // pred_region
      %56 = dma.done [#allocation3], 128
    $region25: #{tpu_custom_call.1} parent=1 // pred_fallthru
      _
    // Predicated region
    $region26: #{tpu_custom_call.1} parent=1 // pred_check
      _
    $region27: #{tpu_custom_call.1} parent=1 // pred_check_branch
      %58 = sbr.rel (0) target = $region29
    $region28: #{tpu_custom_call.1} parent=1 // pred_region
      %59 = dma.done [#allocation6], 512
    $region29: #{tpu_custom_call.1} parent=1 // pred_fallthru
      _
    // Predicated region
    $region30: #{tpu_custom_call.1} parent=1 // pred_check
      _
    $region31: #{tpu_custom_call.1} parent=1 // pred_check_branch
      %61 = sbr.rel (0) target = $region33
    $region32: #{tpu_custom_call.1} parent=1 // pred_region
      %62 = dma.done [#allocation6], 2048
    $region33: #{tpu_custom_call.1} parent=1 // pred_fallthru
      _
    %v63 = vld [vmem:[#allocation2] sm:$0xff]
    %v64 = vld [vmem:[#allocation5] sm:$0xff]
    %v65 = vld [vmem:[#allocation5 + $0x8] sm:$0xff]
    %v66 = vld [vmem:[#allocation5 + $0x10] sm:$0xff]
    %v67 = vld [vmem:[#allocation5 + $0x18] sm:$0xff]
    %vm68 = vcmask 261120
    %v70 = vsel %vm68, %v63, 0
    %72 = vmatprep.subr.mxu0 0.0
    %73 = vmatpush1.msra.mxu0 %v64
    %74 = vmatprep.subr.mxu0 0.0
    %75 = vmatpush1.msra.mxu0 %v65
    %76 = vmatprep.subr.mxu0 0.0
    %77 = vmatpush1.msra.mxu0 %v66
    %78 = vmatprep.subr.mxu0 0.0
    %79 = vmatpush1.msra.mxu0 %v67
    %80 = vmatprep.subr.mxu0 0.0
    %81 = vmatpush1.msra.mxu0 0.0
    %82 = vmatprep.subr.mxu0 0.0
    %83 = vmatpush1.msra.mxu0 0.0
    %84 = vmatprep.subr.mxu0 0.0
    %85 = vmatpush1.msra.mxu0 0.0
    %86 = vmatprep.subr.mxu0 0.0
    %87 = vmatpush1.msra.mxu0 0.0
    %88 = vmatprep.subr.mxu0 0.0
    %89 = vmatpush1.msra.mxu0 0.0
    %90 = vmatprep.subr.mxu0 0.0
    %91 = vmatpush1.msra.mxu0 0.0
    %92 = vmatprep.subr.mxu0 0.0
    %93 = vmatpush1.msra.mxu0 0.0
    %94 = vmatprep.subr.mxu0 0.0
    %95 = vmatpush1.msra.mxu0 0.0
    %96 = vmatprep.subr.mxu0 0.0
    %97 = vmatpush1.msra.mxu0 0.0
    %98 = vmatprep.subr.mxu0 0.0
    %99 = vmatpush1.msra.mxu0 0.0
    %100 = vmatprep.subr.mxu0 0.0
    %101 = vmatpush1.msra.mxu0 0.0
    %102 = vmatprep.subr.mxu0 0.0
    %103 = vmatpush1.msra.mxu0 0.0
    %104 = vmatprep.subr.mxu0 0.0
    %105 = vmatpush1.msra.mxu0 0.0
    %106 = vmatprep.subr.mxu0 0.0
    %107 = vmatpush1.msra.mxu0 0.0
    %108 = vmatprep.subr.mxu0 0.0
    %109 = vmatpush1.msra.mxu0 0.0
    %110 = vmatprep.subr.mxu0 0.0
    %111 = vmatpush1.msra.mxu0 0.0
    %112 = vmatprep.subr.mxu0 0.0
    %113 = vmatpush1.msra.mxu0 0.0
    %114 = vmatprep.subr.mxu0 0.0
    %115 = vmatpush1.msra.mxu0 0.0
    %116 = vmatprep.subr.mxu0 0.0
    %117 = vmatpush1.msra.mxu0 0.0
    %118 = vmatprep.subr.mxu0 0.0
    %119 = vmatpush1.msra.mxu0 0.0
    %120 = vmatprep.subr.mxu0 0.0
    %121 = vmatpush1.msra.mxu0 0.0
    %122 = vmatprep.subr.mxu0 0.0
    %123 = vmatpush1.msra.mxu0 0.0
    %124 = vmatprep.subr.mxu0 0.0
    %125 = vmatpush1.msra.mxu0 0.0
    %126 = vmatprep.subr.mxu0 0.0
    %127 = vmatpush1.msra.mxu0 0.0
    %128 = vmatprep.subr.mxu0 0.0
    %129 = vmatpush1.msra.mxu0 0.0
    %130 = vmatprep.subr.mxu0 0.0
    %131 = vmatpush1.msra.mxu0 0.0
    %132 = vmatprep.subr.mxu0 0.0
    %133 = vmatpush1.msra.mxu0 0.0
    %134 = vmatprep.subr.mxu0 0.0
    %135 = vmatpush1.msra.mxu0 0.0
    %136 = vmatprep.mubr.f32.mxu0 0.0
    %137 = vmatmul.mubr.f32.gmra.mrb[0].mxu0 %v70
    %v138 = vpop.f32.mrb[0].mxu0
    %v139 = vadd.f32 0.0, %v138
    %v140 = vpop.f32.mrb[0].mxu0
    %141 = vdwg.mxu0
    %v142 = vld [vmem:[%s2] sm:$0x1]
    %v144 = vlaneseq
    %v145 = vshrl.u32 %v144, 7
    %v146 = vsub.s32 0, %v145
    %v147 = vrot.slane %v142, %v146
    %v149 = vmul.f32 %v139, %v147
    %v150 = vld [vmem:[%s3] sm:$0x1]
    %v152 = vlaneseq
    %v153 = vshrl.u32 %v152, 7
    %v154 = vsub.s32 0, %v153
    %v155 = vrot.slane %v150, %v154
    %v157 = vadd.f32 %v149, %v155
    %v158 = vlaneseq
    %v159 = vand.u32 %v158, 127
    %vm160 = vcmp.ge.s32.totalorder %v159, 0
    %vm161 = vcmp.lt.s32.totalorder %v159, 3
    %vm162 = vmand %vm160, %vm161
    %v163 = vsel %vm162, 1, 0
    %vm164 = vcmp.eq.s32.totalorder %v163, 1
    %v165 = vsel %vm164, %v157, -inf
    %166 = vmax.xlane.f32.xlu0 %v165
    %v167 = vpop.xlane.xlu0 %166
    %v168 = vsel %vm164, %v167, 0.0
    %vm169 = vcmp.ge.s32.totalorder %v159, 3
    %vm170 = vcmp.lt.s32.totalorder %v159, 7
    %vm171 = vmand %vm169, %vm170
    %v172 = vsel %vm171, 1, 0
    %vm173 = vcmp.eq.s32.totalorder %v172, 1
    %v174 = vsel %vm173, %v157, -inf
    %175 = vmax.xlane.f32.xlu0 %v174
    %v176 = vpop.xlane.xlu0 %175
    %v177 = vsel %vm173, %v176, %v168
    %vm178 = vcmp.ge.s32.totalorder %v159, 7
    %vm179 = vcmp.lt.s32.totalorder %v159, 12
    %vm180 = vmand %vm178, %vm179
    %v181 = vsel %vm180, 1, 0
    %vm182 = vcmp.eq.s32.totalorder %v181, 1
    %v183 = vsel %vm182, %v157, -inf
    %184 = vmax.xlane.f32.xlu0 %v183
    %v185 = vpop.xlane.xlu0 %184
    %v186 = vsel %vm182, %v185, %v177
    %v187 = vsub.f32 %v157, %v186
    %v188 = vmul.f32 %v187, 1.442695
    %v189 = vpow.pop %v188
    %v190 = vld [vmem:[#allocation7] sm:$0xff]
    %v191 = vld [vmem:[#allocation7 + $0x8] sm:$0xff]
    %v192 = vld [vmem:[#allocation7 + $0x10] sm:$0xff]
    %v193 = vld [vmem:[#allocation7 + $0x18] sm:$0xff]
    %v194 = vld [vmem:[#allocation7 + $0x20] sm:$0xff]
    %v195 = vld [vmem:[#allocation7 + $0x28] sm:$0xff]
    %v196 = vld [vmem:[#allocation7 + $0x30] sm:$0xff]
    %v197 = vld [vmem:[#allocation7 + $0x38] sm:$0xff]
    %v198 = vld [vmem:[#allocation7 + $0x40] sm:$0xff]
    %v199 = vld [vmem:[#allocation7 + $0x48] sm:$0xff]
    %v200 = vld [vmem:[#allocation7 + $0x50] sm:$0xff]
    %v201 = vld [vmem:[#allocation7 + $0x58] sm:$0xff]
    %v202 = vld [vmem:[#allocation7 + $0x60] sm:$0xff]
    %v203 = vld [vmem:[#allocation7 + $0x68] sm:$0xff]
    %v204 = vld [vmem:[#allocation7 + $0x70] sm:$0xff]
    %v205 = vld [vmem:[#allocation7 + $0x78] sm:$0xff]
    %206 = vmatprep.subr.mxu0 0.0
    %207 = vmatpush1.msra.mxu0 %v190
    %208 = vmatprep.subr.mxu0 0.0
    %209 = vmatpush1.msra.mxu0 %v191
    %210 = vmatprep.subr.mxu0 0.0
    %211 = vmatpush1.msra.mxu0 %v192
    %212 = vmatprep.subr.mxu0 0.0
    %213 = vmatpush1.msra.mxu0 %v193
    %214 = vmatprep.subr.mxu0 0.0
    %215 = vmatpush1.msra.mxu0 %v194
    %216 = vmatprep.subr.mxu0 0.0
    %217 = vmatpush1.msra.mxu0 %v195
    %218 = vmatprep.subr.mxu0 0.0
    %219 = vmatpush1.msra.mxu0 %v196
    %220 = vmatprep.subr.mxu0 0.0
    %221 = vmatpush1.msra.mxu0 %v197
    %222 = vmatprep.subr.mxu0 0.0
    %223 = vmatpush1.msra.mxu0 %v198
    %224 = vmatprep.subr.mxu0 0.0
    %225 = vmatpush1.msra.mxu0 %v199
    %226 = vmatprep.subr.mxu0 0.0
    %227 = vmatpush1.msra.mxu0 %v200
    %228 = vmatprep.subr.mxu0 0.0
    %229 = vmatpush1.msra.mxu0 %v201
    %230 = vmatprep.subr.mxu0 0.0
    %231 = vmatpush1.msra.mxu0 %v202
    %232 = vmatprep.subr.mxu0 0.0
    %233 = vmatpush1.msra.mxu0 %v203
    %234 = vmatprep.subr.mxu0 0.0
    %235 = vmatpush1.msra.mxu0 %v204
    %236 = vmatprep.subr.mxu0 0.0
    %237 = vmatpush1.msra.mxu0 %v205
    %238 = vmatprep.subr.mxu0 0.0
    %239 = vmatpush1.msra.mxu0 0.0
    %240 = vmatprep.subr.mxu0 0.0
    %241 = vmatpush1.msra.mxu0 0.0
    %242 = vmatprep.subr.mxu0 0.0
    %243 = vmatpush1.msra.mxu0 0.0
    %244 = vmatprep.subr.mxu0 0.0
    %245 = vmatpush1.msra.mxu0 0.0
    %246 = vmatprep.subr.mxu0 0.0
    %247 = vmatpush1.msra.mxu0 0.0
    %248 = vmatprep.subr.mxu0 0.0
    %249 = vmatpush1.msra.mxu0 0.0
    %250 = vmatprep.subr.mxu0 0.0
    %251 = vmatpush1.msra.mxu0 0.0
    %252 = vmatprep.subr.mxu0 0.0
    %253 = vmatpush1.msra.mxu0 0.0
    %254 = vmatprep.subr.mxu0 0.0
    %255 = vmatpush1.msra.mxu0 0.0
    %256 = vmatprep.subr.mxu0 0.0
    %257 = vmatpush1.msra.mxu0 0.0
    %258 = vmatprep.subr.mxu0 0.0
    %259 = vmatpush1.msra.mxu0 0.0
    %260 = vmatprep.subr.mxu0 0.0
    %261 = vmatpush1.msra.mxu0 0.0
    %262 = vmatprep.subr.mxu0 0.0
    %263 = vmatpush1.msra.mxu0 0.0
    %264 = vmatprep.subr.mxu0 0.0
    %265 = vmatpush1.msra.mxu0 0.0
    %266 = vmatprep.subr.mxu0 0.0
    %267 = vmatpush1.msra.mxu0 0.0
    %268 = vmatprep.subr.mxu0 0.0
    %269 = vmatpush1.msra.mxu0 0.0
    %270 = vmatprep.mubr.f32.mxu0 0.0
    %271 = vmatmul.mubr.f32.gmra.mrb[0].mxu0 %v189
    %v272 = vpop.f32.mrb[0].mxu0
    %v273 = vadd.f32 0.0, %v272
    %v274 = vpop.f32.mrb[0].mxu0
    %275 = vdwg.mxu0
    %v276 = vlog2.pop %v273
    %v277 = vmul.f32 %v276, 0.6931472
    %v278 = vsub.f32 %v187, %v277
    %279 = vst [vmem:[#allocation8] sm:$0xff] %v278
    %v280 = vrcp.pop %v273
    %v281 = vmul.f32 %v189, %v280
    %282 = vst [vmem:[#allocation9] sm:$0xff] %v281
    // Predicated region
    $region34: #{tpu_custom_call.1} parent=1 // pred_check
      _
    $region35: #{tpu_custom_call.1} parent=1 // pred_check_branch
      %284 = sbr.rel (0) target = $region37
    $region36: #{tpu_custom_call.1} parent=1 // pred_region
      %s286 = ssub.s32 128, 128
      %287 = vsyncadd [#allocation4], %s286
      %s289 = sshll.u32 [#allocation8], 4
      %s290 = int_to_ptr.vmem [resolvable:$true] %s289
      %292 = dma.vmem_to_hbm [thread:$0]  %s290, 128, %s5, [#allocation4]
    $region37: #{tpu_custom_call.1} parent=1 // pred_fallthru
      _
    // Predicated region
    $region38: #{tpu_custom_call.1} parent=1 // pred_check
      _
    $region39: #{tpu_custom_call.1} parent=1 // pred_check_branch
      %294 = sbr.rel (0) target = $region41
    $region40: #{tpu_custom_call.1} parent=1 // pred_region
      %s296 = ssub.s32 128, 128
      %297 = vsyncadd [#allocation10], %s296
      %s299 = sshll.u32 [#allocation9], 4
      %s300 = int_to_ptr.vmem [resolvable:$true] %s299
      %302 = dma.vmem_to_hbm [thread:$0]  %s300, 128, %s6, [#allocation10]
    $region41: #{tpu_custom_call.1} parent=1 // pred_fallthru
      _
    // Predicated region
    $region42: #{tpu_custom_call.1} parent=1 // pred_check
      _
    $region43: #{tpu_custom_call.1} parent=1 // pred_check_branch
      %304 = sbr.rel (0) target = $region45
    $region44: #{tpu_custom_call.1} parent=1 // pred_region
      %305 = dma.done [#allocation4], 128
    $region45: #{tpu_custom_call.1} parent=1 // pred_fallthru
      _
    // Predicated region
    $region46: #{tpu_custom_call.1} parent=1 // pred_check
      _
    $region47: #{tpu_custom_call.1} parent=1 // pred_check_branch
      %307 = sbr.rel (0) target = $region49
    $region48: #{tpu_custom_call.1} parent=1 // pred_region
      %308 = dma.done [#allocation10], 128
    $region49: #{tpu_custom_call.1} parent=1 // pred_fallthru
      _
    %309 = vsyncpa [#allocation3], 1
    %310 = vsyncpa [#allocation6], 1
    %311 = vsyncpa [#allocation4], 1
    %312 = vsyncpa [#allocation10], 1

</llo_original>
